<compile_context>
chip_gen: v6e
topology: v6e:2x2x1
jax: 0.10.0
libtpu: 0.0.40
codegen_flags: <defaults>
</compile_context>

<pallas_src>
import functools

import jax
import jax.numpy as jnp
from jax.experimental import pallas as pl
from jax.experimental.pallas import tpu as pltpu


def _round_up(x, m):
    return ((x + m - 1) // m) * m


def _head_kernel(x_ref, w1t_ref, w2t_ref, wct_ref, bc_ref, out_ref):
    """One batch tile of the head.

    x_ref  : (TB, C, HW)  feature-map tile (NCHW with spatial flattened; bf16/f32)
    w1t_ref: (C,  Rp)     SE squeeze weight, transposed + zero-padded (bf16)
    w2t_ref: (Rp, C)      SE excite weight, transposed + zero-padded rows (bf16)
    wct_ref: (C,  Np)     classifier weight, transposed + zero-padded (bf16)
    bc_ref : (1,  Np)     classifier bias, zero-padded (f32)
    out_ref: (TB, Np)     padded logits tile (f32)
    """
    # adaptive_avg_pool2d(x, (1,1)): per-channel mean over spatial positions.
    # Lane (XLU) reduction over HW, fully hidden under the x DMA; f32 accumulate.
    x = x_ref[...].astype(jnp.float32)                      # (TB, C, HW)
    pooled = jnp.mean(x, axis=-1)                           # (TB, C) channels on lanes

    # SELayer on the pooled vector (avg-pool of a (B,C,1,1) tensor is itself).
    wdt = w1t_ref.dtype
    h = jnp.maximum(
        jnp.dot(pooled.astype(wdt), w1t_ref[...],
                preferred_element_type=jnp.float32), 0.0)    # (TB, Rp)
    gate = jax.nn.sigmoid(
        jnp.dot(h.astype(wdt), w2t_ref[...],
                preferred_element_type=jnp.float32))         # (TB, C)
    scaled = pooled * gate                                   # x * y.expand_as(x), pooled

    # classifier: Linear(C -> num_classes) on the lane-padded slab
    # (Np = multiple of 128 -> unmasked lane-dense vst on out_ref).
    out_ref[...] = (
        jnp.dot(scaled.astype(wdt), wct_ref[...],
                preferred_element_type=jnp.float32)
        + bc_ref[...])


def prepare_head_params(w1, w2, wc, bc, *, weight_dtype=jnp.bfloat16):
    """One-time parameter prep: transpose + pad to 128-lane granularity.

    w1: (C//r, C)  SE squeeze weight (nn.Linear, no bias)
    w2: (C, C//r)  SE excite weight  (nn.Linear, no bias)
    wc: (NUM, C)   classifier weight
    bc: (NUM,)     classifier bias

    Returns (params, num_classes): `params` is a tuple of device arrays and
    `num_classes` is a Python int to be passed as the static `num_classes=`
    kwarg of efficientnet_b3_head.
    """
    R, C = w1.shape
    num_classes = int(wc.shape[0])
    Rp = _round_up(max(R, 1), 128)      # pad SE hidden dim to full lanes
    Np = _round_up(num_classes, 128)    # pad logits to full lanes (no vst.msk)

    w1t = jnp.zeros((C, Rp), weight_dtype).at[:, :R].set(
        jnp.transpose(w1).astype(weight_dtype))
    w2t = jnp.zeros((Rp, C), weight_dtype).at[:R, :].set(
        jnp.transpose(w2).astype(weight_dtype))
    wct = jnp.zeros((C, Np), weight_dtype).at[:, :num_classes].set(
        jnp.transpose(wc).astype(weight_dtype))
    bcp = jnp.zeros((1, Np), jnp.float32).at[0, :num_classes].set(
        bc.astype(jnp.float32))
    return (w1t, w2t, wct, bcp), num_classes


def _x_spec(block_shape, index_map, buffer_count):
    """x BlockSpec with an optional pipeline-depth override (best effort)."""
    if buffer_count is not None and hasattr(pl, "Buffered"):
        try:
            return pl.BlockSpec(block_shape, index_map,
                                pipeline_mode=pl.Buffered(int(buffer_count)))
        except TypeError:   # older jax without pipeline_mode kwarg
            pass
    return pl.BlockSpec(block_shape, index_map)


@functools.partial(
    jax.jit,
    static_argnames=("num_classes", "batch_tile", "vmem_limit_bytes",
                     "x_buffer_count"))
def efficientnet_b3_head(features_nchw, params, *, num_classes, batch_tile=8,
                         vmem_limit_bytes=None, x_buffer_count=None):
    """Head forward on a backbone feature map; returns (B, num_classes) f32 logits.

    features_nchw: (B, C, H, W) feature map from forward_features (bf16 preferred:
      halves the dominant HBM read; f32 also accepted — accumulation is f32).
    params, num_classes: from prepare_head_params.

    Tile sizing (the kernel is HBM-read bound on the feature map):
      * v6e (128 MiB VMEM): batch_tile=32-64 with vmem_limit_bytes≈96<<20;
        optionally x_buffer_count=3 to deepen the x pipeline.
      * v7x (64 MiB VMEM per TC): batch_tile≈16-24 (f32 features) or 32-48 (bf16)
        with vmem_limit_bytes≈48<<20 — do NOT copy the v6e sizes.
      * v5e (16 MiB scoped default): batch_tile=8-16, or raise vmem_limit_bytes.
    """
    w1t, w2t, wct, bcp = params
    B, C, H, W = features_nchw.shape
    HW = H * W
    Rp = w1t.shape[1]
    Np = wct.shape[1]

    # Consume NCHW directly with spatial flattened — no wrapper-side transpose
    # (pooling happens inside the kernel as a lane reduction).
    x = features_nchw.reshape(B, C, HW)

    # Batch tile: multiple of 8 (output sublane granularity).  For B > 8,
    # guarantee >= 2 grid steps so both v7x TensorCores get work.
    TB = _round_up(min(max(batch_tile, 1), max(B, 1)), 8)
    if B > 8:
        TB = min(TB, _round_up(pl.cdiv(B, 2), 8))
    TB = max(TB, 8)
    Bp = _round_up(B, TB)
    if Bp != B:
        x = jnp.pad(x, ((0, Bp - B), (0, 0), (0, 0)))
    grid = (Bp // TB,)

    # Advisory cost: almost entirely HBM-read bound on x (real itemsizes).
    weight_bytes = sum(int(a.size) * a.dtype.itemsize
                       for a in (w1t, w2t, wct, bcp))
    bytes_accessed = (Bp * C * HW * x.dtype.itemsize      # feature-map read
                      + weight_bytes                      # weights (once)
                      + Bp * Np * 4)                      # logits write
    flops = 2 * Bp * (HW * C + C * Rp + Rp * C + C * Np)
    cost = pl.CostEstimate(flops=flops, transcendentals=Bp * C,
                           bytes_accessed=bytes_accessed)

    # Constant operands: whole-array VMEM residency — fetched once, single
    # buffer (no per-step DMA, no double-buffering of never-changing weights).
    const_spec = pl.BlockSpec(memory_space=pltpu.MemorySpace.VMEM)

    compiler_kwargs = dict(dimension_semantics=("parallel",))
    if vmem_limit_bytes is not None:
        compiler_kwargs["vmem_limit_bytes"] = int(vmem_limit_bytes)

    out = pl.pallas_call(
        _head_kernel,
        out_shape=jax.ShapeDtypeStruct((Bp, Np), jnp.float32),
        grid_spec=pltpu.PrefetchScalarGridSpec(
            num_scalar_prefetch=0,
            grid=grid,
            in_specs=[
                _x_spec((TB, C, HW), lambda b: (b, 0, 0), x_buffer_count),
                const_spec,   # w1t
                const_spec,   # w2t
                const_spec,   # wct
                const_spec,   # bias
            ],
            out_specs=pl.BlockSpec((TB, Np), lambda b: (b, 0)),
        ),
        compiler_params=pltpu.CompilerParams(**compiler_kwargs),
        cost_estimate=cost,
    )(x, w1t, w2t, wct, bcp)

    return out[:B, :num_classes]


def _reference_head(features_nchw, w1, w2, wc, bc):
    pooled = jnp.mean(features_nchw.astype(jnp.float32), axis=(2, 3))  # (B, C)
    h = jnp.maximum(pooled @ w1.T, 0.0)
    gate = jax.nn.sigmoid(h @ w2.T)
    scaled = pooled * gate
    return scaled @ wc.T + bc


if __name__ == "__main__":
    # Small shapes consistent with the module structure:
    #   batch=2, feature channels=32 (reduction 16 -> hidden 2), spatial 8x8,
    #   num_classes=60 (the module default).
    B, C, H, W = 2, 32, 8, 8
    reduction = 16
    n_classes = 60

    key = jax.random.PRNGKey(0)
    k_x, k_w1, k_w2, k_wc, k_bc = jax.random.split(key, 5)

    # Backbone feature map fed in bf16 (mem-bound input); params in f32.
    features = jax.random.normal(k_x, (B, C, H, W),
                                 dtype=jnp.float32).astype(jnp.bfloat16)
    w1 = 0.1 * jax.random.normal(k_w1, (C // reduction, C), dtype=jnp.float32)
    w2 = 0.1 * jax.random.normal(k_w2, (C, C // reduction), dtype=jnp.float32)
    wc = 0.1 * jax.random.normal(k_wc, (n_classes, C), dtype=jnp.float32)
    bc = 0.1 * jax.random.normal(k_bc, (n_classes,), dtype=jnp.float32)

    # One-time parameter prep (transpose + pad + bf16), then the gridded call.
    params, num_classes = prepare_head_params(w1, w2, wc, bc)
    out = efficientnet_b3_head(features, params, num_classes=num_classes,
                               batch_tile=8)
    out = jax.block_until_ready(out)

    # Reference: same bf16 feature map and bf16-rounded weights, f32 math.
    w1r = w1.astype(jnp.bfloat16).astype(jnp.float32)
    w2r = w2.astype(jnp.bfloat16).astype(jnp.float32)
    wcr = wc.astype(jnp.bfloat16).astype(jnp.float32)
    ref = _reference_head(features, w1r, w2r, wcr, bc)

    assert out.shape == (B, num_classes)
    max_err = float(jnp.max(jnp.abs(out - ref)))
    assert jnp.allclose(out, ref, atol=5e-3, rtol=5e-3), f"max_err={max_err}"

    print("KERNEL_OK")
</pallas_src>

<mosaic_0001>
module attributes {stable_mosaic.version = 11 : i64} {
  func.func @_head_kernel(%arg0: i32, %arg1: memref<8x32x64xbf16, #tpu.memory_space<vmem>>, %arg2: memref<32x128xbf16, #tpu.memory_space<vmem>>, %arg3: memref<128x32xbf16, #tpu.memory_space<vmem>>, %arg4: memref<32x128xbf16, #tpu.memory_space<vmem>>, %arg5: memref<1x128xf32, #tpu.memory_space<vmem>>, %arg6: memref<8x128xf32, #tpu.memory_space<vmem>>) attributes {dimension_semantics = [#tpu.dimension_semantics<parallel>], iteration_bounds = array<i64: 1>, scalar_prefetch = 0 : i64, scratch_operands = 0 : i64, tpu.core_type = #tpu.core_type<tc>, window_params = [{transform_indices = @transform_0, window_bounds = array<i64: 8, 32, 64>}, {pipeline_mode = #tpu.pipeline_mode<synchronous>, transform_indices = @transform_1, window_bounds = array<i64: 32, 128>}, {pipeline_mode = #tpu.pipeline_mode<synchronous>, transform_indices = @transform_2, window_bounds = array<i64: 128, 32>}, {pipeline_mode = #tpu.pipeline_mode<synchronous>, transform_indices = @transform_3, window_bounds = array<i64: 32, 128>}, {pipeline_mode = #tpu.pipeline_mode<synchronous>, transform_indices = @transform_4, window_bounds = array<i64: 1, 128>}, {transform_indices = @transform_5, window_bounds = array<i64: 8, 128>}]} {
    %c0 = arith.constant 0 : index
    %c0_0 = arith.constant 0 : index
    %c0_1 = arith.constant 0 : index
    %0 = vector.load %arg1[%c0, %c0_0, %c0_1] : memref<8x32x64xbf16, #tpu.memory_space<vmem>>, vector<8x32x64xbf16>
    %1 = arith.extf %0 : vector<8x32x64xbf16> to vector<8x32x64xf32>
    %cst = arith.constant dense<0.000000e+00> : vector<8x32xf32>
    %2 = vector.multi_reduction <add>, %1, %cst [2] : vector<8x32x64xf32> to vector<8x32xf32>
    %cst_2 = arith.constant 6.400000e+01 : f32
    %3 = vector.broadcast %cst_2 : f32 to vector<8x32xf32>
    %4 = arith.divf %2, %3 : vector<8x32xf32>
    %5 = arith.truncf %4 : vector<8x32xf32> to vector<8x32xbf16>
    %c0_3 = arith.constant 0 : index
    %c0_4 = arith.constant 0 : index
    %6 = vector.load %arg2[%c0_3, %c0_4] : memref<32x128xbf16, #tpu.memory_space<vmem>>, vector<32x128xbf16>
    %cst_5 = arith.constant dense<0.000000e+00> : vector<8x128xf32>
    %7 = tpu.matmul %5, %6, %cst_5 {dimension_numbers = #tpu.dot_dimension_numbers<[1], [0], [0], [1], [0, 0, 1, 1], [], []>} : vector<8x32xbf16>, vector<32x128xbf16>, vector<8x128xf32> -> vector<8x128xf32>
    %cst_6 = arith.constant 0.000000e+00 : f32
    %8 = vector.broadcast %cst_6 : f32 to vector<8x128xf32>
    %9 = arith.maximumf %7, %8 : vector<8x128xf32>
    %10 = arith.truncf %9 : vector<8x128xf32> to vector<8x128xbf16>
    %c0_7 = arith.constant 0 : index
    %c0_8 = arith.constant 0 : index
    %11 = vector.load %arg3[%c0_7, %c0_8] : memref<128x32xbf16, #tpu.memory_space<vmem>>, vector<128x32xbf16>
    %cst_9 = arith.constant dense<0.000000e+00> : vector<8x32xf32>
    %12 = tpu.matmul %10, %11, %cst_9 {dimension_numbers = #tpu.dot_dimension_numbers<[1], [0], [0], [1], [0, 0, 1, 1], [], []>} : vector<8x128xbf16>, vector<128x32xbf16>, vector<8x32xf32> -> vector<8x32xf32>
    %13 = arith.negf %12 : vector<8x32xf32>
    %14 = math.exp %13 : vector<8x32xf32>
    %cst_10 = arith.constant 1.000000e+00 : f32
    %15 = vector.broadcast %cst_10 : f32 to vector<8x32xf32>
    %16 = arith.addf %15, %14 : vector<8x32xf32>
    %17 = arith.divf %15, %16 : vector<8x32xf32>
    %18 = arith.mulf %4, %17 : vector<8x32xf32>
    %19 = arith.truncf %18 : vector<8x32xf32> to vector<8x32xbf16>
    %c0_11 = arith.constant 0 : index
    %c0_12 = arith.constant 0 : index
    %20 = vector.load %arg4[%c0_11, %c0_12] : memref<32x128xbf16, #tpu.memory_space<vmem>>, vector<32x128xbf16>
    %cst_13 = arith.constant dense<0.000000e+00> : vector<8x128xf32>
    %21 = tpu.matmul %19, %20, %cst_13 {dimension_numbers = #tpu.dot_dimension_numbers<[1], [0], [0], [1], [0, 0, 1, 1], [], []>} : vector<8x32xbf16>, vector<32x128xbf16>, vector<8x128xf32> -> vector<8x128xf32>
    %c0_14 = arith.constant 0 : index
    %c0_15 = arith.constant 0 : index
    %22 = vector.load %arg5[%c0_14, %c0_15] : memref<1x128xf32, #tpu.memory_space<vmem>>, vector<1x128xf32>
    %23 = vector.broadcast %22 : vector<1x128xf32> to vector<8x128xf32>
    %24 = arith.addf %21, %23 : vector<8x128xf32>
    %c0_16 = arith.constant 0 : index
    %c0_17 = arith.constant 0 : index
    %25 = vector.load %arg6[%c0_16, %c0_17] : memref<8x128xf32, #tpu.memory_space<vmem>>, vector<8x128xf32>
    tpu.vector_store %arg6[%c0_16, %c0_17], %24 {strides = array<i32>} : memref<8x128xf32, #tpu.memory_space<vmem>>, vector<8x128xf32>,
    return
  }
  func.func @transform_0(%arg0: i32) -> (i32, i32, i32) {
    %c0_i32 = arith.constant 0 : i32
    %c0_i32_0 = arith.constant 0 : i32
    %c0_i32_1 = arith.constant 0 : i32
    return %arg0, %c0_i32, %c0_i32_0 : i32, i32, i32
  }
  func.func @transform_1(%arg0: i32) -> (i32, i32) {
    %c0_i32 = arith.constant 0 : i32
    %c0_i32_0 = arith.constant 0 : i32
    %c0_i32_1 = arith.constant 0 : i32
    return %c0_i32, %c0_i32_0 : i32, i32
  }
  func.func @transform_2(%arg0: i32) -> (i32, i32) {
    %c0_i32 = arith.constant 0 : i32
    %c0_i32_0 = arith.constant 0 : i32
    %c0_i32_1 = arith.constant 0 : i32
    return %c0_i32, %c0_i32_0 : i32, i32
  }
  func.func @transform_3(%arg0: i32) -> (i32, i32) {
    %c0_i32 = arith.constant 0 : i32
    %c0_i32_0 = arith.constant 0 : i32
    %c0_i32_1 = arith.constant 0 : i32
    return %c0_i32, %c0_i32_0 : i32, i32
  }
  func.func @transform_4(%arg0: i32) -> (i32, i32) {
    %c0_i32 = arith.constant 0 : i32
    %c0_i32_0 = arith.constant 0 : i32
    %c0_i32_1 = arith.constant 0 : i32
    return %c0_i32, %c0_i32_0 : i32, i32
  }
  func.func @transform_5(%arg0: i32) -> (i32, i32) {
    %c0_i32 = arith.constant 0 : i32
    %c0_i32_0 = arith.constant 0 : i32
    return %arg0, %c0_i32 : i32, i32
  }
}

</mosaic_0001>

<llo_original>
// kernel: efficientnet_b3_head.1
$region0: #{efficientnet_b3_head.1}
  #allocation0 [shape = 'u32[]', space=smem, size = 0x4, offset = 0x4, fixed_abs, tag = 'smem constant byte address 0x4 - core index']
  #allocation1 [shape = 'u32[144,128]{1,0:T(1,128)}', space=vmem, size = 0x12000, scoped, tag = 'internal scratch']
  %s0 = inlined_call_operand.vmem [shape: bf16[8,32,64], index: 0, kind: input, shape index: {}]
  %s1 = inlined_call_operand.vmem [shape: bf16[32,128], index: 1, kind: input, shape index: {}]
  %s2 = inlined_call_operand.vmem [shape: bf16[128,32], index: 2, kind: input, shape index: {}]
  %s3 = inlined_call_operand.vmem [shape: bf16[32,128], index: 3, kind: input, shape index: {}]
  %s4 = inlined_call_operand.vmem [shape: f32[1,128], index: 4, kind: input, shape index: {}]
  %s5 = inlined_call_operand.vmem [shape: f32[8,128], index: 5, kind: output, shape index: {}]
  %s6 = sld [smem:[#allocation0]]
  $region30: #{efficientnet_b3_head.1} parent=0
    _
  %s8 = ssub.s32 1, %s6
  %s9 = scalar_select 0, %s8, %s6
  // Predicated region
  $region2: #{efficientnet_b3_head.1} parent=0 // pred_check
    _
  $region3: #{efficientnet_b3_head.1} parent=0 // pred_check_branch
    %11 = sbr.rel (0) target = $region5
  $region4: #{efficientnet_b3_head.1} parent=0 // pred_region
    _
  $region5: #{efficientnet_b3_head.1} parent=0 // pred_fallthru
    _
  // Predicated region
  $region6: #{efficientnet_b3_head.1} parent=0 // pred_check
    _
  $region7: #{efficientnet_b3_head.1} parent=0 // pred_check_branch
    %13 = sbr.rel (0) target = $region9
  $region8: #{efficientnet_b3_head.1} parent=0 // pred_region
    _
  $region9: #{efficientnet_b3_head.1} parent=0 // pred_fallthru
    _
  // Predicated region
  $region10: #{efficientnet_b3_head.1} parent=0 // pred_check
    _
  $region11: #{efficientnet_b3_head.1} parent=0 // pred_check_branch
    %15 = sbr.rel (0) target = $region13
  $region12: #{efficientnet_b3_head.1} parent=0 // pred_region
    _
  $region13: #{efficientnet_b3_head.1} parent=0 // pred_fallthru
    _
  // Predicated region
  $region14: #{efficientnet_b3_head.1} parent=0 // pred_check
    _
  $region15: #{efficientnet_b3_head.1} parent=0 // pred_check_branch
    %17 = sbr.rel (0) target = $region17
  $region16: #{efficientnet_b3_head.1} parent=0 // pred_region
    _
  $region17: #{efficientnet_b3_head.1} parent=0 // pred_fallthru
    _
  // Predicated region
  $region18: #{efficientnet_b3_head.1} parent=0 // pred_check
    _
  $region19: #{efficientnet_b3_head.1} parent=0 // pred_check_branch
    %19 = sbr.rel (0) target = $region21
  $region20: #{efficientnet_b3_head.1} parent=0 // pred_region
    _
  $region21: #{efficientnet_b3_head.1} parent=0 // pred_fallthru
    _
  %v21 = vld [vmem:[%s0] sm:$0xf]
  %v22 = vld [vmem:[%s0 + $0x4] sm:$0xf]
  %v23 = vld [vmem:[%s0 + $0x8] sm:$0xf]
  %v24 = vld [vmem:[%s0 + $0xc] sm:$0xf]
  %v25 = vld [vmem:[%s0 + $0x10] sm:$0xf]
  %v26 = vld [vmem:[%s0 + $0x14] sm:$0xf]
  %v27 = vld [vmem:[%s0 + $0x18] sm:$0xf]
  %v28 = vld [vmem:[%s0 + $0x1c] sm:$0xf]
  %v29 = vld [vmem:[%s0 + $0x20] sm:$0xf]
  %v30 = vld [vmem:[%s0 + $0x24] sm:$0xf]
  %v31 = vld [vmem:[%s0 + $0x28] sm:$0xf]
  %v32 = vld [vmem:[%s0 + $0x2c] sm:$0xf]
  %v33 = vld [vmem:[%s0 + $0x30] sm:$0xf]
  %v34 = vld [vmem:[%s0 + $0x34] sm:$0xf]
  %v35 = vld [vmem:[%s0 + $0x38] sm:$0xf]
  %v36 = vld [vmem:[%s0 + $0x3c] sm:$0xf]
  %v37 = vld [vmem:[%s0 + $0x40] sm:$0xf]
  %v38 = vld [vmem:[%s0 + $0x44] sm:$0xf]
  %v39 = vld [vmem:[%s0 + $0x48] sm:$0xf]
  %v40 = vld [vmem:[%s0 + $0x4c] sm:$0xf]
  %v41 = vld [vmem:[%s0 + $0x50] sm:$0xf]
  %v42 = vld [vmem:[%s0 + $0x54] sm:$0xf]
  %v43 = vld [vmem:[%s0 + $0x58] sm:$0xf]
  %v44 = vld [vmem:[%s0 + $0x5c] sm:$0xf]
  %v45 = vld [vmem:[%s0 + $0x60] sm:$0xf]
  %v46 = vld [vmem:[%s0 + $0x64] sm:$0xf]
  %v47 = vld [vmem:[%s0 + $0x68] sm:$0xf]
  %v48 = vld [vmem:[%s0 + $0x6c] sm:$0xf]
  %v49 = vld [vmem:[%s0 + $0x70] sm:$0xf]
  %v50 = vld [vmem:[%s0 + $0x74] sm:$0xf]
  %v51 = vld [vmem:[%s0 + $0x78] sm:$0xf]
  %v52 = vld [vmem:[%s0 + $0x7c] sm:$0xf]
  %v53 = vunpack.c.l.bf16 %v21
  %v54 = vunpack.c.l.bf16 %v22
  %v55 = vunpack.c.l.bf16 %v23
  %v56 = vunpack.c.l.bf16 %v24
  %v57 = vunpack.c.l.bf16 %v25
  %v58 = vunpack.c.l.bf16 %v26
  %v59 = vunpack.c.l.bf16 %v27
  %v60 = vunpack.c.l.bf16 %v28
  %v61 = vunpack.c.l.bf16 %v29
  %v62 = vunpack.c.l.bf16 %v30
  %v63 = vunpack.c.l.bf16 %v31
  %v64 = vunpack.c.l.bf16 %v32
  %v65 = vunpack.c.l.bf16 %v33
  %v66 = vunpack.c.l.bf16 %v34
  %v67 = vunpack.c.l.bf16 %v35
  %v68 = vunpack.c.l.bf16 %v36
  %v69 = vunpack.c.l.bf16 %v37
  %v70 = vunpack.c.l.bf16 %v38
  %v71 = vunpack.c.l.bf16 %v39
  %v72 = vunpack.c.l.bf16 %v40
  %v73 = vunpack.c.l.bf16 %v41
  %v74 = vunpack.c.l.bf16 %v42
  %v75 = vunpack.c.l.bf16 %v43
  %v76 = vunpack.c.l.bf16 %v44
  %v77 = vunpack.c.l.bf16 %v45
  %v78 = vunpack.c.l.bf16 %v46
  %v79 = vunpack.c.l.bf16 %v47
  %v80 = vunpack.c.l.bf16 %v48
  %v81 = vunpack.c.l.bf16 %v49
  %v82 = vunpack.c.l.bf16 %v50
  %v83 = vunpack.c.l.bf16 %v51
  %v84 = vunpack.c.l.bf16 %v52
  %vm85 = vcmask 523264
  %v86 = vsel %vm85, %v53, 0.0
  %87 = vadd.xlane.f32.xlu0 %v86
  %v88 = vpop.xlane.xlu0 %87
  %v89 = vsel %vm85, %v54, 0.0
  %90 = vadd.xlane.f32.xlu0 %v89
  %v91 = vpop.xlane.xlu0 %90
  %v92 = vsel %vm85, %v55, 0.0
  %93 = vadd.xlane.f32.xlu0 %v92
  %v94 = vpop.xlane.xlu0 %93
  %v95 = vsel %vm85, %v56, 0.0
  %96 = vadd.xlane.f32.xlu0 %v95
  %v97 = vpop.xlane.xlu0 %96
  %v98 = vsel %vm85, %v57, 0.0
  %99 = vadd.xlane.f32.xlu0 %v98
  %v100 = vpop.xlane.xlu0 %99
  %v101 = vsel %vm85, %v58, 0.0
  %102 = vadd.xlane.f32.xlu0 %v101
  %v103 = vpop.xlane.xlu0 %102
  %v104 = vsel %vm85, %v59, 0.0
  %105 = vadd.xlane.f32.xlu0 %v104
  %v106 = vpop.xlane.xlu0 %105
  %v107 = vsel %vm85, %v60, 0.0
  %108 = vadd.xlane.f32.xlu0 %v107
  %v109 = vpop.xlane.xlu0 %108
  %v110 = vsel %vm85, %v61, 0.0
  %111 = vadd.xlane.f32.xlu0 %v110
  %v112 = vpop.xlane.xlu0 %111
  %v113 = vsel %vm85, %v62, 0.0
  %114 = vadd.xlane.f32.xlu0 %v113
  %v115 = vpop.xlane.xlu0 %114
  %v116 = vsel %vm85, %v63, 0.0
  %117 = vadd.xlane.f32.xlu0 %v116
  %v118 = vpop.xlane.xlu0 %117
  %v119 = vsel %vm85, %v64, 0.0
  %120 = vadd.xlane.f32.xlu0 %v119
  %v121 = vpop.xlane.xlu0 %120
  %v122 = vsel %vm85, %v65, 0.0
  %123 = vadd.xlane.f32.xlu0 %v122
  %v124 = vpop.xlane.xlu0 %123
  %v125 = vsel %vm85, %v66, 0.0
  %126 = vadd.xlane.f32.xlu0 %v125
  %v127 = vpop.xlane.xlu0 %126
  %v128 = vsel %vm85, %v67, 0.0
  %129 = vadd.xlane.f32.xlu0 %v128
  %v130 = vpop.xlane.xlu0 %129
  %v131 = vsel %vm85, %v68, 0.0
  %132 = vadd.xlane.f32.xlu0 %v131
  %v133 = vpop.xlane.xlu0 %132
  %v134 = vsel %vm85, %v69, 0.0
  %135 = vadd.xlane.f32.xlu0 %v134
  %v136 = vpop.xlane.xlu0 %135
  %v137 = vsel %vm85, %v70, 0.0
  %138 = vadd.xlane.f32.xlu0 %v137
  %v139 = vpop.xlane.xlu0 %138
  %v140 = vsel %vm85, %v71, 0.0
  %141 = vadd.xlane.f32.xlu0 %v140
  %v142 = vpop.xlane.xlu0 %141
  %v143 = vsel %vm85, %v72, 0.0
  %144 = vadd.xlane.f32.xlu0 %v143
  %v145 = vpop.xlane.xlu0 %144
  %v146 = vsel %vm85, %v73, 0.0
  %147 = vadd.xlane.f32.xlu0 %v146
  %v148 = vpop.xlane.xlu0 %147
  %v149 = vsel %vm85, %v74, 0.0
  %150 = vadd.xlane.f32.xlu0 %v149
  %v151 = vpop.xlane.xlu0 %150
  %v152 = vsel %vm85, %v75, 0.0
  %153 = vadd.xlane.f32.xlu0 %v152
  %v154 = vpop.xlane.xlu0 %153
  %v155 = vsel %vm85, %v76, 0.0
  %156 = vadd.xlane.f32.xlu0 %v155
  %v157 = vpop.xlane.xlu0 %156
  %v158 = vsel %vm85, %v77, 0.0
  %159 = vadd.xlane.f32.xlu0 %v158
  %v160 = vpop.xlane.xlu0 %159
  %v161 = vsel %vm85, %v78, 0.0
  %162 = vadd.xlane.f32.xlu0 %v161
  %v163 = vpop.xlane.xlu0 %162
  %v164 = vsel %vm85, %v79, 0.0
  %165 = vadd.xlane.f32.xlu0 %v164
  %v166 = vpop.xlane.xlu0 %165
  %v167 = vsel %vm85, %v80, 0.0
  %168 = vadd.xlane.f32.xlu0 %v167
  %v169 = vpop.xlane.xlu0 %168
  %v170 = vsel %vm85, %v81, 0.0
  %171 = vadd.xlane.f32.xlu0 %v170
  %v172 = vpop.xlane.xlu0 %171
  %v173 = vsel %vm85, %v82, 0.0
  %174 = vadd.xlane.f32.xlu0 %v173
  %v175 = vpop.xlane.xlu0 %174
  %v176 = vsel %vm85, %v83, 0.0
  %177 = vadd.xlane.f32.xlu0 %v176
  %v178 = vpop.xlane.xlu0 %177
  %v179 = vsel %vm85, %v84, 0.0
  %180 = vadd.xlane.f32.xlu0 %v179
  %v181 = vpop.xlane.xlu0 %180
  %v182 = vrcp.pop 64.0
  %v183 = vmul.f32 %v88, %v182
  %v184 = vmul.f32 %v91, %v182
  %v185 = vmul.f32 %v94, %v182
  %v186 = vmul.f32 %v97, %v182
  %v187 = vmul.f32 %v100, %v182
  %v188 = vmul.f32 %v103, %v182
  %v189 = vmul.f32 %v106, %v182
  %v190 = vmul.f32 %v109, %v182
  %v191 = vmul.f32 %v112, %v182
  %v192 = vmul.f32 %v115, %v182
  %v193 = vmul.f32 %v118, %v182
  %v194 = vmul.f32 %v121, %v182
  %v195 = vmul.f32 %v124, %v182
  %v196 = vmul.f32 %v127, %v182
  %v197 = vmul.f32 %v130, %v182
  %v198 = vmul.f32 %v133, %v182
  %v199 = vmul.f32 %v136, %v182
  %v200 = vmul.f32 %v139, %v182
  %v201 = vmul.f32 %v142, %v182
  %v202 = vmul.f32 %v145, %v182
  %v203 = vmul.f32 %v148, %v182
  %v204 = vmul.f32 %v151, %v182
  %v205 = vmul.f32 %v154, %v182
  %v206 = vmul.f32 %v157, %v182
  %v207 = vmul.f32 %v160, %v182
  %v208 = vmul.f32 %v163, %v182
  %v209 = vmul.f32 %v166, %v182
  %v210 = vmul.f32 %v169, %v182
  %v211 = vmul.f32 %v172, %v182
  %v212 = vmul.f32 %v175, %v182
  %v213 = vmul.f32 %v178, %v182
  %v214 = vmul.f32 %v181, %v182
  %v215 = vpack.c.bf16 %v184, %v183
  %v216 = vpack.c.bf16 %v186, %v185
  %v217 = vpack.c.bf16 %v188, %v187
  %v218 = vpack.c.bf16 %v190, %v189
  %v219 = vpack.c.bf16 %v192, %v191
  %v220 = vpack.c.bf16 %v194, %v193
  %v221 = vpack.c.bf16 %v196, %v195
  %v222 = vpack.c.bf16 %v198, %v197
  %v223 = vpack.c.bf16 %v200, %v199
  %v224 = vpack.c.bf16 %v202, %v201
  %v225 = vpack.c.bf16 %v204, %v203
  %v226 = vpack.c.bf16 %v206, %v205
  %v227 = vpack.c.bf16 %v208, %v207
  %v228 = vpack.c.bf16 %v210, %v209
  %v229 = vpack.c.bf16 %v212, %v211
  %v230 = vpack.c.bf16 %v214, %v213
  %v231 = vld [vmem:[%s1] sm:$0xf]
  %v232 = vld [vmem:[%s1 + $0x4] sm:$0xf]
  %v233 = vld [vmem:[%s1 + $0x8] sm:$0xf]
  %v234 = vld [vmem:[%s1 + $0xc] sm:$0xf]
  %v251 = vunpack.c.l.b16 %v215
  %v252 = vunpack.c.h.b16 %v215
  %v253 = vunpack.c.l.b16 %v216
  %v254 = vunpack.c.h.b16 %v216
  %v255 = vunpack.c.l.b16 %v217
  %v256 = vunpack.c.h.b16 %v217
  %v257 = vunpack.c.l.b16 %v218
  %v258 = vunpack.c.h.b16 %v218
  %v259 = vunpack.c.l.b16 %v219
  %v260 = vunpack.c.h.b16 %v219
  %v261 = vunpack.c.l.b16 %v220
  %v262 = vunpack.c.h.b16 %v220
  %v263 = vunpack.c.l.b16 %v221
  %v264 = vunpack.c.h.b16 %v221
  %v265 = vunpack.c.l.b16 %v222
  %v266 = vunpack.c.h.b16 %v222
  %v267 = vunpack.c.l.b16 %v223
  %v268 = vunpack.c.h.b16 %v223
  %v269 = vunpack.c.l.b16 %v224
  %v270 = vunpack.c.h.b16 %v224
  %v271 = vunpack.c.l.b16 %v225
  %v272 = vunpack.c.h.b16 %v225
  %v273 = vunpack.c.l.b16 %v226
  %v274 = vunpack.c.h.b16 %v226
  %v275 = vunpack.c.l.b16 %v227
  %v276 = vunpack.c.h.b16 %v227
  %v277 = vunpack.c.l.b16 %v228
  %v278 = vunpack.c.h.b16 %v228
  %v279 = vunpack.c.l.b16 %v229
  %v280 = vunpack.c.h.b16 %v229
  %v281 = vunpack.c.l.b16 %v230
  %v282 = vunpack.c.h.b16 %v230
  %v283 = vlaneseq
  %v284 = vand.u32 %v283, 127
  %v285 = vlaneseq
  %v286 = vshrl.u32 %v285, 7
  %v287 = vsub.s32 %v284, %v286
  %v288 = vrot.slane %v251, %v287
  %v289 = vadd.s32 %v284, 4294967288
  %v290 = vlaneseq
  %v291 = vshrl.u32 %v290, 7
  %v292 = vsub.s32 %v289, %v291
  %v293 = vrot.slane %v252, %v292
  %vm294 = vcmask 130112
  %v295 = vsel %vm294, %v293, %v288
  %v296 = vadd.s32 %v284, 4294967280
  %v297 = vlaneseq
  %v298 = vshrl.u32 %v297, 7
  %v299 = vsub.s32 %v296, %v298
  %v300 = vrot.slane %v253, %v299
  %vm301 = vcmask 195712
  %v302 = vsel %vm301, %v300, %v295
  %v303 = vadd.s32 %v284, 4294967272
  %v304 = vlaneseq
  %v305 = vshrl.u32 %v304, 7
  %v306 = vsub.s32 %v303, %v305
  %v307 = vrot.slane %v254, %v306
  %vm308 = vcmask 261312
  %v309 = vsel %vm308, %v307, %v302
  %v310 = vlaneseq
  %v311 = vshrl.u32 %v310, 7
  %v312 = vsub.s32 %v284, %v311
  %v313 = vrot.slane %v255, %v312
  %v314 = vlaneseq
  %v315 = vshrl.u32 %v314, 7
  %v316 = vsub.s32 %v289, %v315
  %v317 = vrot.slane %v256, %v316
  %v318 = vsel %vm294, %v317, %v313
  %v319 = vlaneseq
  %v320 = vshrl.u32 %v319, 7
  %v321 = vsub.s32 %v296, %v320
  %v322 = vrot.slane %v257, %v321
  %v323 = vsel %vm301, %v322, %v318
  %v324 = vlaneseq
  %v325 = vshrl.u32 %v324, 7
  %v326 = vsub.s32 %v303, %v325
  %v327 = vrot.slane %v258, %v326
  %v328 = vsel %vm308, %v327, %v323
  %v329 = vlaneseq
  %v330 = vshrl.u32 %v329, 7
  %v331 = vsub.s32 %v284, %v330
  %v332 = vrot.slane %v259, %v331
  %v333 = vlaneseq
  %v334 = vshrl.u32 %v333, 7
  %v335 = vsub.s32 %v289, %v334
  %v336 = vrot.slane %v260, %v335
  %v337 = vsel %vm294, %v336, %v332
  %v338 = vlaneseq
  %v339 = vshrl.u32 %v338, 7
  %v340 = vsub.s32 %v296, %v339
  %v341 = vrot.slane %v261, %v340
  %v342 = vsel %vm301, %v341, %v337
  %v343 = vlaneseq
  %v344 = vshrl.u32 %v343, 7
  %v345 = vsub.s32 %v303, %v344
  %v346 = vrot.slane %v262, %v345
  %v347 = vsel %vm308, %v346, %v342
  %v348 = vlaneseq
  %v349 = vshrl.u32 %v348, 7
  %v350 = vsub.s32 %v284, %v349
  %v351 = vrot.slane %v263, %v350
  %v352 = vlaneseq
  %v353 = vshrl.u32 %v352, 7
  %v354 = vsub.s32 %v289, %v353
  %v355 = vrot.slane %v264, %v354
  %v356 = vsel %vm294, %v355, %v351
  %v357 = vlaneseq
  %v358 = vshrl.u32 %v357, 7
  %v359 = vsub.s32 %v296, %v358
  %v360 = vrot.slane %v265, %v359
  %v361 = vsel %vm301, %v360, %v356
  %v362 = vlaneseq
  %v363 = vshrl.u32 %v362, 7
  %v364 = vsub.s32 %v303, %v363
  %v365 = vrot.slane %v266, %v364
  %v366 = vsel %vm308, %v365, %v361
  %v367 = vlaneseq
  %v368 = vshrl.u32 %v367, 7
  %v369 = vsub.s32 %v284, %v368
  %v370 = vrot.slane %v267, %v369
  %v371 = vlaneseq
  %v372 = vshrl.u32 %v371, 7
  %v373 = vsub.s32 %v289, %v372
  %v374 = vrot.slane %v268, %v373
  %v375 = vsel %vm294, %v374, %v370
  %v376 = vlaneseq
  %v377 = vshrl.u32 %v376, 7
  %v378 = vsub.s32 %v296, %v377
  %v379 = vrot.slane %v269, %v378
  %v380 = vsel %vm301, %v379, %v375
  %v381 = vlaneseq
  %v382 = vshrl.u32 %v381, 7
  %v383 = vsub.s32 %v303, %v382
  %v384 = vrot.slane %v270, %v383
  %v385 = vsel %vm308, %v384, %v380
  %v386 = vlaneseq
  %v387 = vshrl.u32 %v386, 7
  %v388 = vsub.s32 %v284, %v387
  %v389 = vrot.slane %v271, %v388
  %v390 = vlaneseq
  %v391 = vshrl.u32 %v390, 7
  %v392 = vsub.s32 %v289, %v391
  %v393 = vrot.slane %v272, %v392
  %v394 = vsel %vm294, %v393, %v389
  %v395 = vlaneseq
  %v396 = vshrl.u32 %v395, 7
  %v397 = vsub.s32 %v296, %v396
  %v398 = vrot.slane %v273, %v397
  %v399 = vsel %vm301, %v398, %v394
  %v400 = vlaneseq
  %v401 = vshrl.u32 %v400, 7
  %v402 = vsub.s32 %v303, %v401
  %v403 = vrot.slane %v274, %v402
  %v404 = vsel %vm308, %v403, %v399
  %v405 = vlaneseq
  %v406 = vshrl.u32 %v405, 7
  %v407 = vsub.s32 %v284, %v406
  %v408 = vrot.slane %v275, %v407
  %v409 = vlaneseq
  %v410 = vshrl.u32 %v409, 7
  %v411 = vsub.s32 %v289, %v410
  %v412 = vrot.slane %v276, %v411
  %v413 = vsel %vm294, %v412, %v408
  %v414 = vlaneseq
  %v415 = vshrl.u32 %v414, 7
  %v416 = vsub.s32 %v296, %v415
  %v417 = vrot.slane %v277, %v416
  %v418 = vsel %vm301, %v417, %v413
  %v419 = vlaneseq
  %v420 = vshrl.u32 %v419, 7
  %v421 = vsub.s32 %v303, %v420
  %v422 = vrot.slane %v278, %v421
  %v423 = vsel %vm308, %v422, %v418
  %v424 = vlaneseq
  %v425 = vshrl.u32 %v424, 7
  %v426 = vsub.s32 %v284, %v425
  %v427 = vrot.slane %v279, %v426
  %v428 = vlaneseq
  %v429 = vshrl.u32 %v428, 7
  %v430 = vsub.s32 %v289, %v429
  %v431 = vrot.slane %v280, %v430
  %v432 = vsel %vm294, %v431, %v427
  %v433 = vlaneseq
  %v434 = vshrl.u32 %v433, 7
  %v435 = vsub.s32 %v296, %v434
  %v436 = vrot.slane %v281, %v435
  %v437 = vsel %vm301, %v436, %v432
  %v438 = vlaneseq
  %v439 = vshrl.u32 %v438, 7
  %v440 = vsub.s32 %v303, %v439
  %v441 = vrot.slane %v282, %v440
  %v442 = vsel %vm308, %v441, %v437
  %vm443 = vcmask 1041409
  %v444 = vsel %vm443, %v328, %v309
  %vm445 = vcmask 1042434
  %v446 = vsel %vm445, %v347, %v444
  %vm447 = vcmask 1043459
  %v448 = vsel %vm447, %v366, %v446
  %vm449 = vcmask 1044484
  %v450 = vsel %vm449, %v385, %v448
  %vm451 = vcmask 1045509
  %v452 = vsel %vm451, %v404, %v450
  %vm453 = vcmask 1046534
  %v454 = vsel %vm453, %v423, %v452
  %vm455 = vcmask 1047559
  %v456 = vsel %vm455, %v442, %v454
  %v457 = vpack.c.b16 %v456, %v456
  %v462 = vunpack.c.l.b16 %v231
  %v463 = vunpack.c.l.b16 %v232
  %v464 = vunpack.c.l.b16 %v233
  %v465 = vunpack.c.l.b16 %v234
  %v466 = vpack.c.b16 %v463, %v462
  %v467 = vpack.c.b16 %v465, %v464
  %vm470 = vcmask 261120
  %v472 = vsel %vm470, %v457, 0
  %474 = vmatprep.subr.bf16.mxu0 0
  %475 = vmatpush1.bf16.msra.mxu0 0
  %476 = vmatprep.subr.bf16.mxu0 0
  %477 = vmatpush1.bf16.msra.mxu0 0
  %478 = vmatprep.subr.bf16.mxu0 0
  %479 = vmatpush1.bf16.msra.mxu0 0
  %480 = vmatprep.subr.bf16.mxu0 0
  %481 = vmatpush1.bf16.msra.mxu0 0
  %482 = vmatprep.subr.bf16.mxu0 0
  %483 = vmatpush1.bf16.msra.mxu0 0
  %484 = vmatprep.subr.bf16.mxu0 0
  %485 = vmatpush1.bf16.msra.mxu0 0
  %486 = vmatprep.subr.bf16.mxu0 0
  %487 = vmatpush1.bf16.msra.mxu0 %v467
  %488 = vmatprep.subr.bf16.mxu0 0
  %489 = vmatpush1.bf16.msra.mxu0 %v466
  %490 = vmatprep.subr.bf16.mxu0 0
  %491 = vmatpush2.bf16.msra.mxu0 0
  %492 = vmatprep.subr.bf16.mxu0 0
  %493 = vmatpush2.bf16.msra.mxu0 0
  %494 = vmatprep.subr.bf16.mxu0 0
  %495 = vmatpush2.bf16.msra.mxu0 0
  %496 = vmatprep.subr.bf16.mxu0 0
  %497 = vmatpush2.bf16.msra.mxu0 0
  %498 = vmatprep.subr.bf16.mxu0 0
  %499 = vmatpush2.bf16.msra.mxu0 0
  %500 = vmatprep.subr.bf16.mxu0 0
  %501 = vmatpush2.bf16.msra.mxu0 0
  %502 = vmatprep.subr.bf16.mxu0 0
  %503 = vmatpush2.bf16.msra.mxu0 0
  %504 = vmatprep.subr.bf16.mxu0 0
  %505 = vmatpush2.bf16.msra.mxu0 0
  %506 = vmatprep.mubr.bf16.mxu0 0
  %507 = vmatmul.mubr.bf16.gmra.mxu0 %v472
  %v508 = vpop.f32.mrf.mxu0
  %v509 = vadd.f32 0.0, %v508
  %v510 = vpop.f32.mrf.mxu0
  %v511 = vpop.f32.mrf.mxu0
  %v512 = vpop.f32.mrf.mxu0
  %513 = vdwg.mxu0
  %v514 = vmax.f32 %v509, 0.0
  %v515 = vpack.c.bf16 %v514, %v514
  %v516 = vld [vmem:[%s2] sm:$0xf]
  %v517 = vld [vmem:[%s2 + $0x4] sm:$0xf]
  %v518 = vld [vmem:[%s2 + $0x8] sm:$0xf]
  %v519 = vld [vmem:[%s2 + $0xc] sm:$0xf]
  %v520 = vld [vmem:[%s2 + $0x10] sm:$0xf]
  %v521 = vld [vmem:[%s2 + $0x14] sm:$0xf]
  %v522 = vld [vmem:[%s2 + $0x18] sm:$0xf]
  %v523 = vld [vmem:[%s2 + $0x1c] sm:$0xf]
  %v524 = vld [vmem:[%s2 + $0x20] sm:$0xf]
  %v525 = vld [vmem:[%s2 + $0x24] sm:$0xf]
  %v526 = vld [vmem:[%s2 + $0x28] sm:$0xf]
  %v527 = vld [vmem:[%s2 + $0x2c] sm:$0xf]
  %v528 = vld [vmem:[%s2 + $0x30] sm:$0xf]
  %v529 = vld [vmem:[%s2 + $0x34] sm:$0xf]
  %v530 = vld [vmem:[%s2 + $0x38] sm:$0xf]
  %v531 = vld [vmem:[%s2 + $0x3c] sm:$0xf]
  %v548 = vunpack.c.l.b16 %v516
  %v549 = vunpack.c.l.b16 %v517
  %v550 = vunpack.c.l.b16 %v518
  %v551 = vunpack.c.l.b16 %v519
  %v552 = vunpack.c.l.b16 %v520
  %v553 = vunpack.c.l.b16 %v521
  %v554 = vunpack.c.l.b16 %v522
  %v555 = vunpack.c.l.b16 %v523
  %v556 = vunpack.c.l.b16 %v524
  %v557 = vunpack.c.l.b16 %v525
  %v558 = vunpack.c.l.b16 %v526
  %v559 = vunpack.c.l.b16 %v527
  %v560 = vunpack.c.l.b16 %v528
  %v561 = vunpack.c.l.b16 %v529
  %v562 = vunpack.c.l.b16 %v530
  %v563 = vunpack.c.l.b16 %v531
  %v564 = vpack.c.b16 %v549, %v548
  %v565 = vpack.c.b16 %v551, %v550
  %v566 = vpack.c.b16 %v553, %v552
  %v567 = vpack.c.b16 %v555, %v554
  %v568 = vpack.c.b16 %v557, %v556
  %v569 = vpack.c.b16 %v559, %v558
  %v570 = vpack.c.b16 %v561, %v560
  %v571 = vpack.c.b16 %v563, %v562
  %580 = vmatprep.subr.bf16.mxu0 0
  %581 = vmatpush1.bf16.msra.mxu0 %v571
  %582 = vmatprep.subr.bf16.mxu0 0
  %583 = vmatpush1.bf16.msra.mxu0 %v570
  %584 = vmatprep.subr.bf16.mxu0 0
  %585 = vmatpush1.bf16.msra.mxu0 %v569
  %586 = vmatprep.subr.bf16.mxu0 0
  %587 = vmatpush1.bf16.msra.mxu0 %v568
  %588 = vmatprep.subr.bf16.mxu0 0
  %589 = vmatpush1.bf16.msra.mxu0 %v567
  %590 = vmatprep.subr.bf16.mxu0 0
  %591 = vmatpush1.bf16.msra.mxu0 %v566
  %592 = vmatprep.subr.bf16.mxu0 0
  %593 = vmatpush1.bf16.msra.mxu0 %v565
  %594 = vmatprep.subr.bf16.mxu0 0
  %595 = vmatpush1.bf16.msra.mxu0 %v564
  %596 = vmatprep.subr.bf16.mxu0 0
  %597 = vmatpush2.bf16.msra.mxu0 0
  %598 = vmatprep.subr.bf16.mxu0 0
  %599 = vmatpush2.bf16.msra.mxu0 0
  %600 = vmatprep.subr.bf16.mxu0 0
  %601 = vmatpush2.bf16.msra.mxu0 0
  %602 = vmatprep.subr.bf16.mxu0 0
  %603 = vmatpush2.bf16.msra.mxu0 0
  %604 = vmatprep.subr.bf16.mxu0 0
  %605 = vmatpush2.bf16.msra.mxu0 0
  %606 = vmatprep.subr.bf16.mxu0 0
  %607 = vmatpush2.bf16.msra.mxu0 0
  %608 = vmatprep.subr.bf16.mxu0 0
  %609 = vmatpush2.bf16.msra.mxu0 0
  %610 = vmatprep.subr.bf16.mxu0 0
  %611 = vmatpush2.bf16.msra.mxu0 0
  %612 = vmatprep.mubr.bf16.mxu0 0
  %613 = vmatmul.mubr.bf16.gmra.mxu0 %v515
  %v614 = vpop.f32.mrf.mxu0
  %v615 = vadd.f32 0.0, %v614
  %v616 = vpop.f32.mrf.mxu0
  %v617 = vpop.f32.mrf.mxu0
  %v618 = vpop.f32.mrf.mxu0
  %619 = vdwg.mxu0
  %v620 = vxor.u32 %v615, 2147483648
  %v621 = vmul.f32 %v620, 1.442695
  %v622 = vpow.pop %v621
  %v623 = vadd.f32 %v622, 1.0
  %v624 = vrcp.pop %v623
  %v625 = vmul.f32 1.0, %v624
  %v627 = vlaneseq
  %v628 = vshrl.u32 %v627, 7
  %v629 = vsub.s32 0, %v628
  %v630 = vrot.slane %v625, %v629
  %632 = vbcast.lane.b32.xlu0 %v630, 256
  %v633 = vpop.permute.xlu0 %632
  %s635 = sor.u32 256, 8
  %636 = vbcast.lane.b32.xlu0 %v630, %s635
  %v637 = vpop.permute.xlu0 %636
  %s639 = sor.u32 256, 16
  %640 = vbcast.lane.b32.xlu0 %v630, %s639
  %v641 = vpop.permute.xlu0 %640
  %s643 = sor.u32 256, 24
  %644 = vbcast.lane.b32.xlu0 %v630, %s643
  %v645 = vpop.permute.xlu0 %644
  %v646 = vlaneseq
  %v647 = vshrl.u32 %v646, 7
  %v648 = vsub.s32 1, %v647
  %v649 = vrot.slane %v625, %v648
  %651 = vbcast.lane.b32.xlu0 %v649, 256
  %v652 = vpop.permute.xlu0 %651
  %s654 = sor.u32 256, 8
  %655 = vbcast.lane.b32.xlu0 %v649, %s654
  %v656 = vpop.permute.xlu0 %655
  %s658 = sor.u32 256, 16
  %659 = vbcast.lane.b32.xlu0 %v649, %s658
  %v660 = vpop.permute.xlu0 %659
  %s662 = sor.u32 256, 24
  %663 = vbcast.lane.b32.xlu0 %v649, %s662
  %v664 = vpop.permute.xlu0 %663
  %v665 = vlaneseq
  %v666 = vshrl.u32 %v665, 7
  %v667 = vsub.s32 2, %v666
  %v668 = vrot.slane %v625, %v667
  %670 = vbcast.lane.b32.xlu0 %v668, 256
  %v671 = vpop.permute.xlu0 %670
  %s673 = sor.u32 256, 8
  %674 = vbcast.lane.b32.xlu0 %v668, %s673
  %v675 = vpop.permute.xlu0 %674
  %s677 = sor.u32 256, 16
  %678 = vbcast.lane.b32.xlu0 %v668, %s677
  %v679 = vpop.permute.xlu0 %678
  %s681 = sor.u32 256, 24
  %682 = vbcast.lane.b32.xlu0 %v668, %s681
  %v683 = vpop.permute.xlu0 %682
  %v684 = vlaneseq
  %v685 = vshrl.u32 %v684, 7
  %v686 = vsub.s32 3, %v685
  %v687 = vrot.slane %v625, %v686
  %689 = vbcast.lane.b32.xlu0 %v687, 256
  %v690 = vpop.permute.xlu0 %689
  %s692 = sor.u32 256, 8
  %693 = vbcast.lane.b32.xlu0 %v687, %s692
  %v694 = vpop.permute.xlu0 %693
  %s696 = sor.u32 256, 16
  %697 = vbcast.lane.b32.xlu0 %v687, %s696
  %v698 = vpop.permute.xlu0 %697
  %s700 = sor.u32 256, 24
  %701 = vbcast.lane.b32.xlu0 %v687, %s700
  %v702 = vpop.permute.xlu0 %701
  %v703 = vlaneseq
  %v704 = vshrl.u32 %v703, 7
  %v705 = vsub.s32 4, %v704
  %v706 = vrot.slane %v625, %v705
  %708 = vbcast.lane.b32.xlu0 %v706, 256
  %v709 = vpop.permute.xlu0 %708
  %s711 = sor.u32 256, 8
  %712 = vbcast.lane.b32.xlu0 %v706, %s711
  %v713 = vpop.permute.xlu0 %712
  %s715 = sor.u32 256, 16
  %716 = vbcast.lane.b32.xlu0 %v706, %s715
  %v717 = vpop.permute.xlu0 %716
  %s719 = sor.u32 256, 24
  %720 = vbcast.lane.b32.xlu0 %v706, %s719
  %v721 = vpop.permute.xlu0 %720
  %v722 = vlaneseq
  %v723 = vshrl.u32 %v722, 7
  %v724 = vsub.s32 5, %v723
  %v725 = vrot.slane %v625, %v724
  %727 = vbcast.lane.b32.xlu0 %v725, 256
  %v728 = vpop.permute.xlu0 %727
  %s730 = sor.u32 256, 8
  %731 = vbcast.lane.b32.xlu0 %v725, %s730
  %v732 = vpop.permute.xlu0 %731
  %s734 = sor.u32 256, 16
  %735 = vbcast.lane.b32.xlu0 %v725, %s734
  %v736 = vpop.permute.xlu0 %735
  %s738 = sor.u32 256, 24
  %739 = vbcast.lane.b32.xlu0 %v725, %s738
  %v740 = vpop.permute.xlu0 %739
  %v741 = vlaneseq
  %v742 = vshrl.u32 %v741, 7
  %v743 = vsub.s32 6, %v742
  %v744 = vrot.slane %v625, %v743
  %746 = vbcast.lane.b32.xlu0 %v744, 256
  %v747 = vpop.permute.xlu0 %746
  %s749 = sor.u32 256, 8
  %750 = vbcast.lane.b32.xlu0 %v744, %s749
  %v751 = vpop.permute.xlu0 %750
  %s753 = sor.u32 256, 16
  %754 = vbcast.lane.b32.xlu0 %v744, %s753
  %v755 = vpop.permute.xlu0 %754
  %s757 = sor.u32 256, 24
  %758 = vbcast.lane.b32.xlu0 %v744, %s757
  %v759 = vpop.permute.xlu0 %758
  %v760 = vlaneseq
  %v761 = vshrl.u32 %v760, 7
  %v762 = vsub.s32 7, %v761
  %v763 = vrot.slane %v625, %v762
  %765 = vbcast.lane.b32.xlu0 %v763, 256
  %v766 = vpop.permute.xlu0 %765
  %s768 = sor.u32 256, 8
  %769 = vbcast.lane.b32.xlu0 %v763, %s768
  %v770 = vpop.permute.xlu0 %769
  %s772 = sor.u32 256, 16
  %773 = vbcast.lane.b32.xlu0 %v763, %s772
  %v774 = vpop.permute.xlu0 %773
  %s776 = sor.u32 256, 24
  %777 = vbcast.lane.b32.xlu0 %v763, %s776
  %v778 = vpop.permute.xlu0 %777
  %v811 = vmul.f32 %v183, %v633
  %v812 = vmul.f32 %v184, %v637
  %v813 = vmul.f32 %v185, %v641
  %v814 = vmul.f32 %v186, %v645
  %v815 = vmul.f32 %v187, %v652
  %v816 = vmul.f32 %v188, %v656
  %v817 = vmul.f32 %v189, %v660
  %v818 = vmul.f32 %v190, %v664
  %v819 = vmul.f32 %v191, %v671
  %v820 = vmul.f32 %v192, %v675
  %v821 = vmul.f32 %v193, %v679
  %v822 = vmul.f32 %v194, %v683
  %v823 = vmul.f32 %v195, %v690
  %v824 = vmul.f32 %v196, %v694
  %v825 = vmul.f32 %v197, %v698
  %v826 = vmul.f32 %v198, %v702
  %v827 = vmul.f32 %v199, %v709
  %v828 = vmul.f32 %v200, %v713
  %v829 = vmul.f32 %v201, %v717
  %v830 = vmul.f32 %v202, %v721
  %v831 = vmul.f32 %v203, %v728
  %v832 = vmul.f32 %v204, %v732
  %v833 = vmul.f32 %v205, %v736
  %v834 = vmul.f32 %v206, %v740
  %v835 = vmul.f32 %v207, %v747
  %v836 = vmul.f32 %v208, %v751
  %v837 = vmul.f32 %v209, %v755
  %v838 = vmul.f32 %v210, %v759
  %v839 = vmul.f32 %v211, %v766
  %v840 = vmul.f32 %v212, %v770
  %v841 = vmul.f32 %v213, %v774
  %v842 = vmul.f32 %v214, %v778
  %v843 = vpack.c.bf16 %v812, %v811
  %v844 = vpack.c.bf16 %v814, %v813
  %v845 = vpack.c.bf16 %v816, %v815
  %v846 = vpack.c.bf16 %v818, %v817
  %v847 = vpack.c.bf16 %v820, %v819
  %v848 = vpack.c.bf16 %v822, %v821
  %v849 = vpack.c.bf16 %v824, %v823
  %v850 = vpack.c.bf16 %v826, %v825
  %v851 = vpack.c.bf16 %v828, %v827
  %v852 = vpack.c.bf16 %v830, %v829
  %v853 = vpack.c.bf16 %v832, %v831
  %v854 = vpack.c.bf16 %v834, %v833
  %v855 = vpack.c.bf16 %v836, %v835
  %v856 = vpack.c.bf16 %v838, %v837
  %v857 = vpack.c.bf16 %v840, %v839
  %v858 = vpack.c.bf16 %v842, %v841
  %v859 = vld [vmem:[%s3] sm:$0xf]
  %v860 = vld [vmem:[%s3 + $0x4] sm:$0xf]
  %v861 = vld [vmem:[%s3 + $0x8] sm:$0xf]
  %v862 = vld [vmem:[%s3 + $0xc] sm:$0xf]
  %v863 = vld [vmem:[%s4] sm:$0x1]
  %v865 = vlaneseq
  %v866 = vshrl.u32 %v865, 7
  %v867 = vsub.s32 0, %v866
  %v868 = vrot.slane %v863, %v867
  %v886 = vunpack.c.l.b16 %v843
  %v887 = vunpack.c.h.b16 %v843
  %v888 = vunpack.c.l.b16 %v844
  %v889 = vunpack.c.h.b16 %v844
  %v890 = vunpack.c.l.b16 %v845
  %v891 = vunpack.c.h.b16 %v845
  %v892 = vunpack.c.l.b16 %v846
  %v893 = vunpack.c.h.b16 %v846
  %v894 = vunpack.c.l.b16 %v847
  %v895 = vunpack.c.h.b16 %v847
  %v896 = vunpack.c.l.b16 %v848
  %v897 = vunpack.c.h.b16 %v848
  %v898 = vunpack.c.l.b16 %v849
  %v899 = vunpack.c.h.b16 %v849
  %v900 = vunpack.c.l.b16 %v850
  %v901 = vunpack.c.h.b16 %v850
  %v902 = vunpack.c.l.b16 %v851
  %v903 = vunpack.c.h.b16 %v851
  %v904 = vunpack.c.l.b16 %v852
  %v905 = vunpack.c.h.b16 %v852
  %v906 = vunpack.c.l.b16 %v853
  %v907 = vunpack.c.h.b16 %v853
  %v908 = vunpack.c.l.b16 %v854
  %v909 = vunpack.c.h.b16 %v854
  %v910 = vunpack.c.l.b16 %v855
  %v911 = vunpack.c.h.b16 %v855
  %v912 = vunpack.c.l.b16 %v856
  %v913 = vunpack.c.h.b16 %v856
  %v914 = vunpack.c.l.b16 %v857
  %v915 = vunpack.c.h.b16 %v857
  %v916 = vunpack.c.l.b16 %v858
  %v917 = vunpack.c.h.b16 %v858
  %918 = vset.pattern.permute.xlu0 0
  %919 = vperm.xlu0 %918, %v886
  %v920 = vpop.permute.xlu0 %919
  %921 = vset.pattern.permute.xlu0 0
  %922 = vperm.xlu0 %921, %v887
  %v923 = vpop.permute.xlu0 %922
  %924 = vset.pattern.permute.xlu0 0
  %925 = vperm.xlu0 %924, %v888
  %v926 = vpop.permute.xlu0 %925
  %927 = vset.pattern.permute.xlu0 0
  %928 = vperm.xlu0 %927, %v889
  %v929 = vpop.permute.xlu0 %928
  %930 = vset.pattern.permute.xlu0 0
  %931 = vperm.xlu0 %930, %v890
  %v932 = vpop.permute.xlu0 %931
  %933 = vset.pattern.permute.xlu0 0
  %934 = vperm.xlu0 %933, %v891
  %v935 = vpop.permute.xlu0 %934
  %936 = vset.pattern.permute.xlu0 0
  %937 = vperm.xlu0 %936, %v892
  %v938 = vpop.permute.xlu0 %937
  %939 = vset.pattern.permute.xlu0 0
  %940 = vperm.xlu0 %939, %v893
  %v941 = vpop.permute.xlu0 %940
  %942 = vset.pattern.permute.xlu0 0
  %943 = vperm.xlu0 %942, %v894
  %v944 = vpop.permute.xlu0 %943
  %945 = vset.pattern.permute.xlu0 0
  %946 = vperm.xlu0 %945, %v895
  %v947 = vpop.permute.xlu0 %946
  %948 = vset.pattern.permute.xlu0 0
  %949 = vperm.xlu0 %948, %v896
  %v950 = vpop.permute.xlu0 %949
  %951 = vset.pattern.permute.xlu0 0
  %952 = vperm.xlu0 %951, %v897
  %v953 = vpop.permute.xlu0 %952
  %954 = vset.pattern.permute.xlu0 0
  %955 = vperm.xlu0 %954, %v898
  %v956 = vpop.permute.xlu0 %955
  %957 = vset.pattern.permute.xlu0 0
  %958 = vperm.xlu0 %957, %v899
  %v959 = vpop.permute.xlu0 %958
  %960 = vset.pattern.permute.xlu0 0
  %961 = vperm.xlu0 %960, %v900
  %v962 = vpop.permute.xlu0 %961
  %963 = vset.pattern.permute.xlu0 0
  %964 = vperm.xlu0 %963, %v901
  %v965 = vpop.permute.xlu0 %964
  %966 = vset.pattern.permute.xlu0 0
  %967 = vperm.xlu0 %966, %v902
  %v968 = vpop.permute.xlu0 %967
  %969 = vset.pattern.permute.xlu0 0
  %970 = vperm.xlu0 %969, %v903
  %v971 = vpop.permute.xlu0 %970
  %972 = vset.pattern.permute.xlu0 0
  %973 = vperm.xlu0 %972, %v904
  %v974 = vpop.permute.xlu0 %973
  %975 = vset.pattern.permute.xlu0 0
  %976 = vperm.xlu0 %975, %v905
  %v977 = vpop.permute.xlu0 %976
  %978 = vset.pattern.permute.xlu0 0
  %979 = vperm.xlu0 %978, %v906
  %v980 = vpop.permute.xlu0 %979
  %981 = vset.pattern.permute.xlu0 0
  %982 = vperm.xlu0 %981, %v907
  %v983 = vpop.permute.xlu0 %982
  %984 = vset.pattern.permute.xlu0 0
  %985 = vperm.xlu0 %984, %v908
  %v986 = vpop.permute.xlu0 %985
  %987 = vset.pattern.permute.xlu0 0
  %988 = vperm.xlu0 %987, %v909
  %v989 = vpop.permute.xlu0 %988
  %990 = vset.pattern.permute.xlu0 0
  %991 = vperm.xlu0 %990, %v910
  %v992 = vpop.permute.xlu0 %991
  %993 = vset.pattern.permute.xlu0 0
  %994 = vperm.xlu0 %993, %v911
  %v995 = vpop.permute.xlu0 %994
  %996 = vset.pattern.permute.xlu0 0
  %997 = vperm.xlu0 %996, %v912
  %v998 = vpop.permute.xlu0 %997
  %999 = vset.pattern.permute.xlu0 0
  %1000 = vperm.xlu0 %999, %v913
  %v1001 = vpop.permute.xlu0 %1000
  %1002 = vset.pattern.permute.xlu0 0
  %1003 = vperm.xlu0 %1002, %v914
  %v1004 = vpop.permute.xlu0 %1003
  %1005 = vset.pattern.permute.xlu0 0
  %1006 = vperm.xlu0 %1005, %v915
  %v1007 = vpop.permute.xlu0 %1006
  %1008 = vset.pattern.permute.xlu0 0
  %1009 = vperm.xlu0 %1008, %v916
  %v1010 = vpop.permute.xlu0 %1009
  %1011 = vset.pattern.permute.xlu0 0
  %1012 = vperm.xlu0 %1011, %v917
  %v1013 = vpop.permute.xlu0 %1012
  %v1014 = vlaneseq
  %v1015 = vshrl.u32 %v1014, 7
  %v1016 = vsub.s32 %v284, %v1015
  %v1017 = vrot.slane %v920, %v1016
  %v1018 = vlaneseq
  %v1019 = vshrl.u32 %v1018, 7
  %v1020 = vsub.s32 %v289, %v1019
  %v1021 = vrot.slane %v923, %v1020
  %v1022 = vsel %vm294, %v1021, %v1017
  %v1023 = vlaneseq
  %v1024 = vshrl.u32 %v1023, 7
  %v1025 = vsub.s32 %v296, %v1024
  %v1026 = vrot.slane %v926, %v1025
  %v1027 = vsel %vm301, %v1026, %v1022
  %v1028 = vlaneseq
  %v1029 = vshrl.u32 %v1028, 7
  %v1030 = vsub.s32 %v303, %v1029
  %v1031 = vrot.slane %v929, %v1030
  %v1032 = vsel %vm308, %v1031, %v1027
  %v1033 = vlaneseq
  %v1034 = vshrl.u32 %v1033, 7
  %v1035 = vsub.s32 %v284, %v1034
  %v1036 = vrot.slane %v932, %v1035
  %v1037 = vlaneseq
  %v1038 = vshrl.u32 %v1037, 7
  %v1039 = vsub.s32 %v289, %v1038
  %v1040 = vrot.slane %v935, %v1039
  %v1041 = vsel %vm294, %v1040, %v1036
  %v1042 = vlaneseq
  %v1043 = vshrl.u32 %v1042, 7
  %v1044 = vsub.s32 %v296, %v1043
  %v1045 = vrot.slane %v938, %v1044
  %v1046 = vsel %vm301, %v1045, %v1041
  %v1047 = vlaneseq
  %v1048 = vshrl.u32 %v1047, 7
  %v1049 = vsub.s32 %v303, %v1048
  %v1050 = vrot.slane %v941, %v1049
  %v1051 = vsel %vm308, %v1050, %v1046
  %v1052 = vlaneseq
  %v1053 = vshrl.u32 %v1052, 7
  %v1054 = vsub.s32 %v284, %v1053
  %v1055 = vrot.slane %v944, %v1054
  %v1056 = vlaneseq
  %v1057 = vshrl.u32 %v1056, 7
  %v1058 = vsub.s32 %v289, %v1057
  %v1059 = vrot.slane %v947, %v1058
  %v1060 = vsel %vm294, %v1059, %v1055
  %v1061 = vlaneseq
  %v1062 = vshrl.u32 %v1061, 7
  %v1063 = vsub.s32 %v296, %v1062
  %v1064 = vrot.slane %v950, %v1063
  %v1065 = vsel %vm301, %v1064, %v1060
  %v1066 = vlaneseq
  %v1067 = vshrl.u32 %v1066, 7
  %v1068 = vsub.s32 %v303, %v1067
  %v1069 = vrot.slane %v953, %v1068
  %v1070 = vsel %vm308, %v1069, %v1065
  %v1071 = vlaneseq
  %v1072 = vshrl.u32 %v1071, 7
  %v1073 = vsub.s32 %v284, %v1072
  %v1074 = vrot.slane %v956, %v1073
  %v1075 = vlaneseq
  %v1076 = vshrl.u32 %v1075, 7
  %v1077 = vsub.s32 %v289, %v1076
  %v1078 = vrot.slane %v959, %v1077
  %v1079 = vsel %vm294, %v1078, %v1074
  %v1080 = vlaneseq
  %v1081 = vshrl.u32 %v1080, 7
  %v1082 = vsub.s32 %v296, %v1081
  %v1083 = vrot.slane %v962, %v1082
  %v1084 = vsel %vm301, %v1083, %v1079
  %v1085 = vlaneseq
  %v1086 = vshrl.u32 %v1085, 7
  %v1087 = vsub.s32 %v303, %v1086
  %v1088 = vrot.slane %v965, %v1087
  %v1089 = vsel %vm308, %v1088, %v1084
  %v1090 = vlaneseq
  %v1091 = vshrl.u32 %v1090, 7
  %v1092 = vsub.s32 %v284, %v1091
  %v1093 = vrot.slane %v968, %v1092
  %v1094 = vlaneseq
  %v1095 = vshrl.u32 %v1094, 7
  %v1096 = vsub.s32 %v289, %v1095
  %v1097 = vrot.slane %v971, %v1096
  %v1098 = vsel %vm294, %v1097, %v1093
  %v1099 = vlaneseq
  %v1100 = vshrl.u32 %v1099, 7
  %v1101 = vsub.s32 %v296, %v1100
  %v1102 = vrot.slane %v974, %v1101
  %v1103 = vsel %vm301, %v1102, %v1098
  %v1104 = vlaneseq
  %v1105 = vshrl.u32 %v1104, 7
  %v1106 = vsub.s32 %v303, %v1105
  %v1107 = vrot.slane %v977, %v1106
  %v1108 = vsel %vm308, %v1107, %v1103
  %v1109 = vlaneseq
  %v1110 = vshrl.u32 %v1109, 7
  %v1111 = vsub.s32 %v284, %v1110
  %v1112 = vrot.slane %v980, %v1111
  %v1113 = vlaneseq
  %v1114 = vshrl.u32 %v1113, 7
  %v1115 = vsub.s32 %v289, %v1114
  %v1116 = vrot.slane %v983, %v1115
  %v1117 = vsel %vm294, %v1116, %v1112
  %v1118 = vlaneseq
  %v1119 = vshrl.u32 %v1118, 7
  %v1120 = vsub.s32 %v296, %v1119
  %v1121 = vrot.slane %v986, %v1120
  %v1122 = vsel %vm301, %v1121, %v1117
  %v1123 = vlaneseq
  %v1124 = vshrl.u32 %v1123, 7
  %v1125 = vsub.s32 %v303, %v1124
  %v1126 = vrot.slane %v989, %v1125
  %v1127 = vsel %vm308, %v1126, %v1122
  %v1128 = vlaneseq
  %v1129 = vshrl.u32 %v1128, 7
  %v1130 = vsub.s32 %v284, %v1129
  %v1131 = vrot.slane %v992, %v1130
  %v1132 = vlaneseq
  %v1133 = vshrl.u32 %v1132, 7
  %v1134 = vsub.s32 %v289, %v1133
  %v1135 = vrot.slane %v995, %v1134
  %v1136 = vsel %vm294, %v1135, %v1131
  %v1137 = vlaneseq
  %v1138 = vshrl.u32 %v1137, 7
  %v1139 = vsub.s32 %v296, %v1138
  %v1140 = vrot.slane %v998, %v1139
  %v1141 = vsel %vm301, %v1140, %v1136
  %v1142 = vlaneseq
  %v1143 = vshrl.u32 %v1142, 7
  %v1144 = vsub.s32 %v303, %v1143
  %v1145 = vrot.slane %v1001, %v1144
  %v1146 = vsel %vm308, %v1145, %v1141
  %v1147 = vlaneseq
  %v1148 = vshrl.u32 %v1147, 7
  %v1149 = vsub.s32 %v284, %v1148
  %v1150 = vrot.slane %v1004, %v1149
  %v1151 = vlaneseq
  %v1152 = vshrl.u32 %v1151, 7
  %v1153 = vsub.s32 %v289, %v1152
  %v1154 = vrot.slane %v1007, %v1153
  %v1155 = vsel %vm294, %v1154, %v1150
  %v1156 = vlaneseq
  %v1157 = vshrl.u32 %v1156, 7
  %v1158 = vsub.s32 %v296, %v1157
  %v1159 = vrot.slane %v1010, %v1158
  %v1160 = vsel %vm301, %v1159, %v1155
  %v1161 = vlaneseq
  %v1162 = vshrl.u32 %v1161, 7
  %v1163 = vsub.s32 %v303, %v1162
  %v1164 = vrot.slane %v1013, %v1163
  %v1165 = vsel %vm308, %v1164, %v1160
  %v1166 = vsel %vm443, %v1051, %v1032
  %v1167 = vsel %vm445, %v1070, %v1166
  %v1168 = vsel %vm447, %v1089, %v1167
  %v1169 = vsel %vm449, %v1108, %v1168
  %v1170 = vsel %vm451, %v1127, %v1169
  %v1171 = vsel %vm453, %v1146, %v1170
  %v1172 = vsel %vm455, %v1165, %v1171
  %v1173 = vpack.c.b16 %v1172, %v1172
  %v1178 = vunpack.c.l.b16 %v859
  %v1179 = vunpack.c.l.b16 %v860
  %v1180 = vunpack.c.l.b16 %v861
  %v1181 = vunpack.c.l.b16 %v862
  %v1182 = vpack.c.b16 %v1179, %v1178
  %v1183 = vpack.c.b16 %v1181, %v1180
  %v1187 = vsel %vm470, %v1173, 0
  %1189 = vmatprep.subr.bf16.mxu0 0
  %1190 = vmatpush1.bf16.msra.mxu0 0
  %1191 = vmatprep.subr.bf16.mxu0 0
  %1192 = vmatpush1.bf16.msra.mxu0 0
  %1193 = vmatprep.subr.bf16.mxu0 0
  %1194 = vmatpush1.bf16.msra.mxu0 0
  %1195 = vmatprep.subr.bf16.mxu0 0
  %1196 = vmatpush1.bf16.msra.mxu0 0
  %1197 = vmatprep.subr.bf16.mxu0 0
  %1198 = vmatpush1.bf16.msra.mxu0 0
  %1199 = vmatprep.subr.bf16.mxu0 0
  %1200 = vmatpush1.bf16.msra.mxu0 0
  %1201 = vmatprep.subr.bf16.mxu0 0
  %1202 = vmatpush1.bf16.msra.mxu0 %v1183
  %1203 = vmatprep.subr.bf16.mxu0 0
  %1204 = vmatpush1.bf16.msra.mxu0 %v1182
  %1205 = vmatprep.subr.bf16.mxu0 0
  %1206 = vmatpush2.bf16.msra.mxu0 0
  %1207 = vmatprep.subr.bf16.mxu0 0
  %1208 = vmatpush2.bf16.msra.mxu0 0
  %1209 = vmatprep.subr.bf16.mxu0 0
  %1210 = vmatpush2.bf16.msra.mxu0 0
  %1211 = vmatprep.subr.bf16.mxu0 0
  %1212 = vmatpush2.bf16.msra.mxu0 0
  %1213 = vmatprep.subr.bf16.mxu0 0
  %1214 = vmatpush2.bf16.msra.mxu0 0
  %1215 = vmatprep.subr.bf16.mxu0 0
  %1216 = vmatpush2.bf16.msra.mxu0 0
  %1217 = vmatprep.subr.bf16.mxu0 0
  %1218 = vmatpush2.bf16.msra.mxu0 0
  %1219 = vmatprep.subr.bf16.mxu0 0
  %1220 = vmatpush2.bf16.msra.mxu0 0
  %1221 = vmatprep.mubr.bf16.mxu0 0
  %1222 = vmatmul.mubr.bf16.gmra.mxu0 %v1187
  %v1223 = vpop.f32.mrf.mxu0
  %v1224 = vadd.f32 %v868, %v1223
  %v1225 = vpop.f32.mrf.mxu0
  %v1226 = vpop.f32.mrf.mxu0
  %v1227 = vpop.f32.mrf.mxu0
  %1228 = vdwg.mxu0
  %1229 = vst [vmem:[%s5] sm:$0xff] %v1224
  // Predicated region
  $region22: #{efficientnet_b3_head.1} parent=0 // pred_check
    _
  $region23: #{efficientnet_b3_head.1} parent=0 // pred_check_branch
    %1231 = sbr.rel (0) target = $region25
  $region24: #{efficientnet_b3_head.1} parent=0 // pred_region
    _
  $region25: #{efficientnet_b3_head.1} parent=0 // pred_fallthru
    _
  // Predicated region
  $region26: #{efficientnet_b3_head.1} parent=0 // pred_check
    _
  $region27: #{efficientnet_b3_head.1} parent=0 // pred_check_branch
    %1233 = sbr.rel (0) target = $region29
  $region28: #{efficientnet_b3_head.1} parent=0 // pred_region
    _
  $region29: #{efficientnet_b3_head.1} parent=0 // pred_fallthru
    _

</llo_original>
